<compile_context>
chip_gen: v7x
topology: tpu7x:2x2x1
jax: 0.10.0
libtpu: 0.0.40
codegen_flags: <defaults>
</compile_context>

<pallas_src>
import functools

import jax
import jax.numpy as jnp
from jax.experimental import pallas as pl
from jax.experimental.pallas import tpu as pltpu

HEAD_DIM = 64
SCALE = HEAD_DIM ** (-0.5)
LANE = 128
QKV_PAD = 2 * LANE  # fused qkv RHS padded from 192 to 256 lanes


def _attention_kernel(x_ref, wqkv_ref, bqkv_ref, wp_ref, bp_ref, o_ref, *,
                      batch, seq, matmul_dtype, approx_recip):
    """Single-invocation kernel; everything resident in VMEM.

    x_ref: (B*N, C) f32; wqkv_ref: (C, 256) matmul_dtype (SCALE pre-folded into
    q columns, zero-padded lanes 192:256); bqkv_ref: (1, 256) f32;
    wp_ref: (64, OP) matmul_dtype; bp_ref: (1, OP) f32;
    o_ref: (B*N, OP) f32 with OP a multiple of 128 (lane-dense stores).
    """
    # In-kernel cast (VPU, hidden under MXU latency) instead of a wrapper op.
    x = x_ref[...].astype(matmul_dtype)                          # (B*N, C)

    # --- fused qkv projection: one wide (256-lane) MXU push, batch-wide M ---
    qkv = jnp.dot(x, wqkv_ref[...],
                  preferred_element_type=jnp.float32) + bqkv_ref[...]
    q = qkv[:, 0:HEAD_DIM]                                       # already scaled
    k = qkv[:, HEAD_DIM:2 * HEAD_DIM]
    v = qkv[:, 2 * HEAD_DIM:3 * HEAD_DIM]
    q = q.reshape(batch, seq, HEAD_DIM).astype(matmul_dtype)
    k = k.reshape(batch, seq, HEAD_DIM).astype(matmul_dtype)
    v = v.reshape(batch, seq, HEAD_DIM).astype(matmul_dtype)

    # --- batched scaled-dot-product attention (no per-batch Python loop;
    #     exp/sum/max/reciprocal run once over the whole (B,N,N) tensor) ---
    s = jnp.einsum('bqd,bkd->bqk', q, k,
                   preferred_element_type=jnp.float32)           # (B, N, N) f32
    s = s - jnp.max(s, axis=-1, keepdims=True)
    p = jnp.exp(s)
    denom = jnp.sum(p, axis=-1, keepdims=True)
    p = p * pl.reciprocal(denom, approx=approx_recip)            # softmax, f32
    # attn_drop(p) with p_drop = 0.0 -> identity
    ctx = jnp.einsum('bqk,bkd->bqd', p.astype(matmul_dtype), v,
                     preferred_element_type=jnp.float32)         # (B, N, 64)

    # --- output projection fused in (no VMEM scratch round trip),
    #     lane-dense padded output -> unmasked vst writeback ---
    ctx2d = ctx.reshape(batch * seq, HEAD_DIM).astype(matmul_dtype)
    out = jnp.dot(ctx2d, wp_ref[...],
                  preferred_element_type=jnp.float32) + bp_ref[...]
    # proj_drop(out) with p_drop = 0.0 -> identity
    o_ref[...] = out.astype(o_ref.dtype)


def prepare_attention_params(wqkv, bqkv, wproj, bproj, *,
                             matmul_dtype=jnp.bfloat16):
    """One-time weight prep: qkv fusion + SCALE fold + lane padding + casts.

    wqkv: (C, 192); bqkv: (1, 192); wproj: (64, 3*dim); bproj: (1, 3*dim).
    """
    out_dim = wproj.shape[1]
    out_pad = pl.cdiv(out_dim, LANE) * LANE                      # lane-dense

    wq, wk, wv = (wqkv[:, i * HEAD_DIM:(i + 1) * HEAD_DIM] for i in range(3))
    bq, bk, bv = (bqkv[:, i * HEAD_DIM:(i + 1) * HEAD_DIM] for i in range(3))
    # Fold the 64^-0.5 softmax scale into the q slab of the fused weight/bias.
    wqkv_f = jnp.concatenate([wq * SCALE, wk, wv], axis=1)       # (C, 192)
    bqkv_f = jnp.concatenate([bq * SCALE, bk, bv], axis=1)       # (1, 192)
    wqkv_f = jnp.pad(wqkv_f, ((0, 0), (0, QKV_PAD - 3 * HEAD_DIM)))
    bqkv_f = jnp.pad(bqkv_f, ((0, 0), (0, QKV_PAD - 3 * HEAD_DIM)))

    pad = out_pad - out_dim
    wp = jnp.pad(wproj, ((0, 0), (0, pad))) if pad else wproj
    bp = jnp.pad(bproj, ((0, 0), (0, pad))) if pad else bproj

    params = dict(
        wqkv=wqkv_f.astype(matmul_dtype),
        bqkv=bqkv_f.astype(jnp.float32),
        wp=wp.astype(matmul_dtype),
        bp=bp.astype(jnp.float32),
        out_dim=out_dim,
        out_pad=out_pad,
        matmul_dtype=matmul_dtype,
    )
    # Materialize now so none of this prep lands on the per-call graph.
    return {key: (jax.block_until_ready(val) if isinstance(val, jax.Array)
                  else val) for key, val in params.items()}


def attention_forward(x, params):
    """x: (B, N, C) f32, params from prepare_attention_params.

    Returns (B, N, 3*dim) f32."""
    B, N, C = x.shape
    M = B * N
    mdt = params['matmul_dtype']
    out_dim, out_pad = params['out_dim'], params['out_pad']

    x2d = x.reshape(M, C)   # merges leading dims only; no data movement

    kernel = functools.partial(
        _attention_kernel, batch=B, seq=N, matmul_dtype=mdt,
        approx_recip=(mdt != jnp.float32))

    itemsize = jnp.dtype(mdt).itemsize
    cost = pl.CostEstimate(
        flops=(2 * M * C * QKV_PAD            # fused qkv projection
               + 4 * B * N * N * HEAD_DIM     # scores + attn @ v
               + 2 * M * HEAD_DIM * out_pad), # output projection
        transcendentals=B * N * N + B * N,    # exp + reciprocal
        bytes_accessed=(x2d.size * 4
                        + params['wqkv'].size * itemsize + params['bqkv'].size * 4
                        + params['wp'].size * itemsize + params['bp'].size * 4
                        + M * out_pad * 4))

    vmem_spec = pl.BlockSpec(memory_space=pltpu.MemorySpace.VMEM)

    # Single invocation (grid=()): per-grid-step overhead (~0.35 us) dominates
    # at these sizes and the whole problem fits comfortably in VMEM.
    # TODO(synk): for larger B add a leading batch grid axis with
    # dimension_semantics=("parallel",) to engage both v7x TensorCores; for
    # large N switch to a flash-style (B, N//tq, N//tk) grid with online-softmax
    # scratch, sizing tiles for v7x's 64 MiB VMEM (not v5e/v6e's 128 MiB).
    out2d = pl.pallas_call(
        kernel,
        out_shape=jax.ShapeDtypeStruct((M, out_pad), jnp.float32),
        in_specs=[vmem_spec] * 5,
        out_specs=vmem_spec,
        cost_estimate=cost,
    )(x2d, params['wqkv'], params['bqkv'], params['wp'], params['bp'])

    # TODO(synk): if the downstream consumer accepts a 128-lane-padded output,
    # return out2d directly and drop this slice.
    return out2d[:, :out_dim].reshape(B, N, out_dim)


def reference_forward(x, wqkv, bqkv, wproj, bproj):
    qkv = x @ wqkv + bqkv
    q, k, v = qkv[..., :64], qkv[..., 64:128], qkv[..., 128:]
    attn = jnp.einsum("bnd,bmd->bnm", q, k) * SCALE
    attn = jax.nn.softmax(attn, axis=-1)
    ctx = jnp.einsum("bnm,bmd->bnd", attn, v)
    return ctx @ wproj + bproj


if __name__ == "__main__":
    B, N, dim = 2, 16, 32

    key = jax.random.PRNGKey(0)
    kx, k1, k2, k3, k4 = jax.random.split(key, 5)

    x = jax.random.normal(kx, (B, N, dim), dtype=jnp.float32)

    # nn.Linear(dim, 192): weight (192, dim), bias (192,) -> stored transposed.
    bound_qkv = 1.0 / (dim ** 0.5)
    wqkv = jax.random.uniform(k1, (dim, 3 * HEAD_DIM), jnp.float32,
                              -bound_qkv, bound_qkv)
    bqkv = jax.random.uniform(k2, (1, 3 * HEAD_DIM), jnp.float32,
                              -bound_qkv, bound_qkv)

    # nn.Linear(64, 3*dim): weight (3*dim, 64), bias (3*dim,) -> stored transposed.
    bound_proj = 1.0 / (HEAD_DIM ** 0.5)
    wproj = jax.random.uniform(k3, (HEAD_DIM, 3 * dim), jnp.float32,
                               -bound_proj, bound_proj)
    bproj = jax.random.uniform(k4, (1, 3 * dim), jnp.float32,
                               -bound_proj, bound_proj)

    ref = reference_forward(x, wqkv, bqkv, wproj, bproj)

    # Exact-numerics path (f32 MXU operands, exact reciprocal): tight check.
    params_f32 = prepare_attention_params(wqkv, bqkv, wproj, bproj,
                                          matmul_dtype=jnp.float32)
    out_f32 = jax.block_until_ready(attention_forward(x, params_f32))
    assert out_f32.shape == (B, N, 3 * dim)
    assert jnp.allclose(out_f32, ref, atol=1e-4, rtol=1e-4)

    # Fast path (bf16 MXU operands + approx reciprocal, f32 accumulation).
    # Tolerance reflects bf16 operand rounding (~0.4% relative), not kernel
    # logic — the f32 path above validates the logic at 1e-4.
    params_bf16 = prepare_attention_params(wqkv, bqkv, wproj, bproj,
                                           matmul_dtype=jnp.bfloat16)
    out_bf16 = jax.block_until_ready(attention_forward(x, params_bf16))
    assert out_bf16.shape == (B, N, 3 * dim)
    assert jnp.allclose(out_bf16, ref, atol=5e-2, rtol=5e-2)

    print("KERNEL_OK")
</pallas_src>

<mosaic_0001>
module attributes {stable_mosaic.version = 11 : i64} {
  func.func @_attention_kernel(%arg0: memref<32x32xf32, #tpu.memory_space<vmem>>, %arg1: memref<32x256xf32, #tpu.memory_space<vmem>>, %arg2: memref<1x256xf32, #tpu.memory_space<vmem>>, %arg3: memref<64x128xf32, #tpu.memory_space<vmem>>, %arg4: memref<1x128xf32, #tpu.memory_space<vmem>>, %arg5: memref<32x128xf32, #tpu.memory_space<vmem>>) attributes {dimension_semantics = [], scalar_prefetch = 0 : i64, scratch_operands = 0 : i64, tpu.core_type = #tpu.core_type<tc>} {
    %c0 = arith.constant 0 : index
    %c0_0 = arith.constant 0 : index
    %0 = vector.load %arg0[%c0, %c0_0] : memref<32x32xf32, #tpu.memory_space<vmem>>, vector<32x32xf32>
    %c0_1 = arith.constant 0 : index
    %c0_2 = arith.constant 0 : index
    %1 = vector.load %arg1[%c0_1, %c0_2] : memref<32x256xf32, #tpu.memory_space<vmem>>, vector<32x256xf32>
    %cst = arith.constant dense<0.000000e+00> : vector<32x256xf32>
    %2 = tpu.matmul %0, %1, %cst {dimension_numbers = #tpu.dot_dimension_numbers<[1], [0], [0], [1], [0, 0, 1, 1], [], []>} : vector<32x32xf32>, vector<32x256xf32>, vector<32x256xf32> -> vector<32x256xf32>
    %c0_3 = arith.constant 0 : index
    %c0_4 = arith.constant 0 : index
    %3 = vector.load %arg2[%c0_3, %c0_4] : memref<1x256xf32, #tpu.memory_space<vmem>>, vector<1x256xf32>
    %4 = vector.broadcast %3 : vector<1x256xf32> to vector<32x256xf32>
    %5 = arith.addf %2, %4 : vector<32x256xf32>
    %6 = vector.extract_strided_slice %5 {offsets = [0, 0], sizes = [32, 64], strides = [1, 1]} : vector<32x256xf32> to vector<32x64xf32>
    %7 = vector.extract_strided_slice %5 {offsets = [0, 64], sizes = [32, 64], strides = [1, 1]} : vector<32x256xf32> to vector<32x64xf32>
    %8 = vector.extract_strided_slice %5 {offsets = [0, 128], sizes = [32, 64], strides = [1, 1]} : vector<32x256xf32> to vector<32x64xf32>
    %9 = vector.shape_cast %6 : vector<32x64xf32> to vector<2x16x64xf32>
    %10 = vector.shape_cast %7 : vector<32x64xf32> to vector<2x16x64xf32>
    %11 = vector.shape_cast %8 : vector<32x64xf32> to vector<2x16x64xf32>
    "tpu.trace_start"() <{level = 10 : i32, message = "bqd,bkd->bqk"}> : () -> ()
    %cst_5 = arith.constant dense<0.000000e+00> : vector<2x16x16xf32>
    %12 = tpu.matmul %9, %10, %cst_5 {dimension_numbers = #tpu.dot_dimension_numbers<[2], [2], [1], [1], [0, 0, 0, 1, 1, 1], [0], [0]>} : vector<2x16x64xf32>, vector<2x16x64xf32>, vector<2x16x16xf32> -> vector<2x16x16xf32>
    "tpu.trace_stop"() : () -> ()
    %cst_6 = arith.constant dense<0xFF800000> : vector<2x16xf32>
    %13 = vector.multi_reduction <maximumf>, %12, %cst_6 [2] : vector<2x16x16xf32> to vector<2x16xf32>
    %14 = vector.shape_cast %13 : vector<2x16xf32> to vector<2x16x1xf32>
    %15 = vector.broadcast %14 : vector<2x16x1xf32> to vector<2x16x16xf32>
    %16 = arith.subf %12, %15 : vector<2x16x16xf32>
    %17 = math.exp %16 : vector<2x16x16xf32>
    %cst_7 = arith.constant dense<0.000000e+00> : vector<2x16xf32>
    %18 = vector.multi_reduction <add>, %17, %cst_7 [2] : vector<2x16x16xf32> to vector<2x16xf32>
    %19 = vector.shape_cast %18 : vector<2x16xf32> to vector<2x16x1xf32>
    %20 = tpu.reciprocal %19 : vector<2x16x1xf32> -> vector<2x16x1xf32>
    %21 = vector.broadcast %20 : vector<2x16x1xf32> to vector<2x16x16xf32>
    %22 = arith.mulf %17, %21 : vector<2x16x16xf32>
    "tpu.trace_start"() <{level = 10 : i32, message = "bqk,bkd->bqd"}> : () -> ()
    %cst_8 = arith.constant dense<0.000000e+00> : vector<2x16x64xf32>
    %23 = tpu.matmul %22, %11, %cst_8 {dimension_numbers = #tpu.dot_dimension_numbers<[2], [1], [1], [2], [0, 0, 0, 1, 1, 2], [0], [0]>} : vector<2x16x16xf32>, vector<2x16x64xf32>, vector<2x16x64xf32> -> vector<2x16x64xf32>
    "tpu.trace_stop"() : () -> ()
    %24 = vector.shape_cast %23 : vector<2x16x64xf32> to vector<32x64xf32>
    %c0_9 = arith.constant 0 : index
    %c0_10 = arith.constant 0 : index
    %25 = vector.load %arg3[%c0_9, %c0_10] : memref<64x128xf32, #tpu.memory_space<vmem>>, vector<64x128xf32>
    %cst_11 = arith.constant dense<0.000000e+00> : vector<32x128xf32>
    %26 = tpu.matmul %24, %25, %cst_11 {dimension_numbers = #tpu.dot_dimension_numbers<[1], [0], [0], [1], [0, 0, 1, 1], [], []>} : vector<32x64xf32>, vector<64x128xf32>, vector<32x128xf32> -> vector<32x128xf32>
    %c0_12 = arith.constant 0 : index
    %c0_13 = arith.constant 0 : index
    %27 = vector.load %arg4[%c0_12, %c0_13] : memref<1x128xf32, #tpu.memory_space<vmem>>, vector<1x128xf32>
    %28 = vector.broadcast %27 : vector<1x128xf32> to vector<32x128xf32>
    %29 = arith.addf %26, %28 : vector<32x128xf32>
    %c0_14 = arith.constant 0 : index
    %c0_15 = arith.constant 0 : index
    %30 = vector.load %arg5[%c0_14, %c0_15] : memref<32x128xf32, #tpu.memory_space<vmem>>, vector<32x128xf32>
    tpu.vector_store %arg5[%c0_14, %c0_15], %29 {strides = array<i32>} : memref<32x128xf32, #tpu.memory_space<vmem>>, vector<32x128xf32>,
    return
  }
}

</mosaic_0001>

<llo_original>
// kernel: tpu_custom_call.1
$region0: #{tpu_custom_call.1}
  #allocation0 [shape = 'u32[]', space=smem, size = 0x4, offset = 0x4, fixed_abs, tag = 'smem constant byte address 0x4 - core index']
  #allocation1 [shape = 'u32[144,128]{1,0:T(1,128)}', space=vmem, size = 0x12000, scoped, tag = 'internal scratch']
  %s0 = inlined_call_operand.hbm [shape: f32[32,32], index: 0, kind: input, shape index: {}]
  %s1 = inlined_call_operand.hbm [shape: f32[32,256], index: 1, kind: input, shape index: {}]
  %s2 = inlined_call_operand.vmem [shape: f32[1,256], index: 2, kind: input, shape index: {}]
  %s3 = inlined_call_operand.hbm [shape: f32[64,128], index: 3, kind: input, shape index: {}]
  %s4 = inlined_call_operand.vmem [shape: f32[1,128], index: 4, kind: input, shape index: {}]
  %s5 = inlined_call_operand.hbm [shape: f32[32,128], index: 5, kind: output, shape index: {}]
  %s6 = sld [smem:[#allocation0]]
  $region42: #{tpu_custom_call.1} parent=0
    _
  %s8 = ssub.s32 1, %s6
  %s9 = scalar_select 0, %s8, %s6
  $region1: #{tpu_custom_call.1} parent=0
    #allocation2 [shape = 'u8[16384]{0}', space=vmem, size = 0x4000, scoped, tag = 'input window, operand 0, single buffered']
    #allocation3 [shape = 's32[1]{0}', space=sflag, size = 0x4, scoped, tag = 'scoped memory for tpu_custom_call.1']
    #allocation4 [shape = 's32[1]{0}', space=sflag, size = 0x4, scoped, tag = 'scoped memory for tpu_custom_call.1']
    #allocation5 [shape = 'u8[32768]{0}', space=vmem, size = 0x8000, scoped, tag = 'input window, operand 1, single buffered']
    #allocation6 [shape = 's32[1]{0}', space=sflag, size = 0x4, scoped, tag = 'scoped memory for tpu_custom_call.1']
    #allocation7 [shape = 'u8[32768]{0}', space=vmem, size = 0x8000, scoped, tag = 'input window, operand 3, single buffered']
    #allocation8 [shape = 'u8[16384]{0}', space=vmem, size = 0x4000, scoped, tag = 'output window, operand 0, single buffered']
    %10 = vsyncpa [#allocation3], 0
    %11 = vsyncpa [#allocation6], 0
    %12 = vsyncpa [#allocation4], 0
    // Predicated region
    $region2: #{tpu_custom_call.1} parent=1 // pred_check
      _
    $region3: #{tpu_custom_call.1} parent=1 // pred_check_branch
      %14 = sbr.rel (0) target = $region5
    $region4: #{tpu_custom_call.1} parent=1 // pred_region
      %s16 = ssub.s32 512, 512
      %17 = vsyncadd [#allocation3], %s16
      %s18 = sshll.u32 [#allocation2], 4
      %s19 = int_to_ptr.vmem [resolvable:$true] %s18
      %24 = dma.hbm_to_vmem [thread:$0]  %s0, 512, %s19, [#allocation3], 128, 128, 8
    $region5: #{tpu_custom_call.1} parent=1 // pred_fallthru
      _
    // Predicated region
    $region6: #{tpu_custom_call.1} parent=1 // pred_check
      _
    $region7: #{tpu_custom_call.1} parent=1 // pred_check_branch
      %26 = sbr.rel (0) target = $region9
    $region8: #{tpu_custom_call.1} parent=1 // pred_region
      %s28 = ssub.s32 1024, 1024
      %29 = vsyncadd [#allocation6], %s28
      %s30 = sshll.u32 [#allocation5], 4
      %s31 = int_to_ptr.vmem [resolvable:$true] %s30
      %36 = dma.hbm_to_vmem [thread:$0]  %s1, 1024, %s31, [#allocation6], 256, 256, 16
    $region9: #{tpu_custom_call.1} parent=1 // pred_fallthru
      _
    // Predicated region
    $region10: #{tpu_custom_call.1} parent=1 // pred_check
      _
    $region11: #{tpu_custom_call.1} parent=1 // pred_check_branch
      %38 = sbr.rel (0) target = $region13
    $region12: #{tpu_custom_call.1} parent=1 // pred_region
      _
    $region13: #{tpu_custom_call.1} parent=1 // pred_fallthru
      _
    // Predicated region
    $region14: #{tpu_custom_call.1} parent=1 // pred_check
      _
    $region15: #{tpu_custom_call.1} parent=1 // pred_check_branch
      %40 = sbr.rel (0) target = $region17
    $region16: #{tpu_custom_call.1} parent=1 // pred_region
      %s42 = ssub.s32 1024, 1024
      %43 = vsyncadd [#allocation6], %s42
      %s44 = sshll.u32 [#allocation7], 4
      %s45 = int_to_ptr.vmem [resolvable:$true] %s44
      %50 = dma.hbm_to_vmem [thread:$0]  %s3, 1024, %s45, [#allocation6], 128, 128, 8
    $region17: #{tpu_custom_call.1} parent=1 // pred_fallthru
      _
    // Predicated region
    $region18: #{tpu_custom_call.1} parent=1 // pred_check
      _
    $region19: #{tpu_custom_call.1} parent=1 // pred_check_branch
      %52 = sbr.rel (0) target = $region21
    $region20: #{tpu_custom_call.1} parent=1 // pred_region
      _
    $region21: #{tpu_custom_call.1} parent=1 // pred_fallthru
      _
    // Predicated region
    $region22: #{tpu_custom_call.1} parent=1 // pred_check
      _
    $region23: #{tpu_custom_call.1} parent=1 // pred_check_branch
      %54 = sbr.rel (0) target = $region25
    $region24: #{tpu_custom_call.1} parent=1 // pred_region
      %55 = dma.done [#allocation3], 512
    $region25: #{tpu_custom_call.1} parent=1 // pred_fallthru
      _
    // Predicated region
    $region26: #{tpu_custom_call.1} parent=1 // pred_check
      _
    $region27: #{tpu_custom_call.1} parent=1 // pred_check_branch
      %57 = sbr.rel (0) target = $region29
    $region28: #{tpu_custom_call.1} parent=1 // pred_region
      %58 = dma.done [#allocation6], 1024
    $region29: #{tpu_custom_call.1} parent=1 // pred_fallthru
      _
    // Predicated region
    $region30: #{tpu_custom_call.1} parent=1 // pred_check
      _
    $region31: #{tpu_custom_call.1} parent=1 // pred_check_branch
      %60 = sbr.rel (0) target = $region33
    $region32: #{tpu_custom_call.1} parent=1 // pred_region
      %61 = dma.done [#allocation6], 1024
    $region33: #{tpu_custom_call.1} parent=1 // pred_fallthru
      _
    %v62 = vld [vmem:[#allocation2] sm:$0xff]
    %v63 = vld [vmem:[#allocation2 + $0x8] sm:$0xff]
    %v64 = vld [vmem:[#allocation2 + $0x10] sm:$0xff]
    %v65 = vld [vmem:[#allocation2 + $0x18] sm:$0xff]
    %v66 = vld [vmem:[#allocation5] sm:$0xff]
    %v67 = vld [vmem:[#allocation5 + $0x8] sm:$0xff]
    %v68 = vld [vmem:[#allocation5 + $0x10] sm:$0xff]
    %v69 = vld [vmem:[#allocation5 + $0x18] sm:$0xff]
    %v70 = vld [vmem:[#allocation5 + $0x20] sm:$0xff]
    %v71 = vld [vmem:[#allocation5 + $0x28] sm:$0xff]
    %v72 = vld [vmem:[#allocation5 + $0x30] sm:$0xff]
    %v73 = vld [vmem:[#allocation5 + $0x38] sm:$0xff]
    %v74 = vld [vmem:[%s2] sm:$0x3]
    %v76 = vlaneseq
    %v77 = vshrl.u32 %v76, 7
    %v78 = vsub.s32 0, %v77
    %v79 = vrot.slane %v74, %v78
    %v80 = vlaneseq
    %v81 = vshrl.u32 %v80, 7
    %v82 = vsub.s32 1, %v81
    %v83 = vrot.slane %v74, %v82
    %vm86 = vcmask 261120
    %v88 = vsel %vm86, %v62, 0
    %v91 = vsel %vm86, %v63, 0
    %v94 = vsel %vm86, %v64, 0
    %v97 = vsel %vm86, %v65, 0
    %99 = vmatprep.subr.mxu0 %v67
    %100 = vmatpush1.msra.mxu0 %v66
    %101 = vmatprep.subr.mxu0 %v69
    %102 = vmatpush1.msra.mxu0 %v68
    %103 = vmatprep.subr.mxu0 %v71
    %104 = vmatpush1.msra.mxu0 %v70
    %105 = vmatprep.subr.mxu0 %v73
    %106 = vmatpush1.msra.mxu0 %v72
    %107 = vmatprep.subr.mxu0 0.0
    %108 = vmatpush1.msra.mxu0 0.0
    %109 = vmatprep.subr.mxu0 0.0
    %110 = vmatpush1.msra.mxu0 0.0
    %111 = vmatprep.subr.mxu0 0.0
    %112 = vmatpush1.msra.mxu0 0.0
    %113 = vmatprep.subr.mxu0 0.0
    %114 = vmatpush1.msra.mxu0 0.0
    %115 = vmatprep.subr.mxu0 0.0
    %116 = vmatpush1.msra.mxu0 0.0
    %117 = vmatprep.subr.mxu0 0.0
    %118 = vmatpush1.msra.mxu0 0.0
    %119 = vmatprep.subr.mxu0 0.0
    %120 = vmatpush1.msra.mxu0 0.0
    %121 = vmatprep.subr.mxu0 0.0
    %122 = vmatpush1.msra.mxu0 0.0
    %123 = vmatprep.subr.mxu0 0.0
    %124 = vmatpush1.msra.mxu0 0.0
    %125 = vmatprep.subr.mxu0 0.0
    %126 = vmatpush1.msra.mxu0 0.0
    %127 = vmatprep.subr.mxu0 0.0
    %128 = vmatpush1.msra.mxu0 0.0
    %129 = vmatprep.subr.mxu0 0.0
    %130 = vmatpush1.msra.mxu0 0.0
    %131 = vmatprep.subr.mxu0 0.0
    %132 = vmatpush1.msra.mxu0 0.0
    %133 = vmatprep.subr.mxu0 0.0
    %134 = vmatpush1.msra.mxu0 0.0
    %135 = vmatprep.subr.mxu0 0.0
    %136 = vmatpush1.msra.mxu0 0.0
    %137 = vmatprep.subr.mxu0 0.0
    %138 = vmatpush1.msra.mxu0 0.0
    %139 = vmatprep.subr.mxu0 0.0
    %140 = vmatpush1.msra.mxu0 0.0
    %141 = vmatprep.subr.mxu0 0.0
    %142 = vmatpush1.msra.mxu0 0.0
    %143 = vmatprep.subr.mxu0 0.0
    %144 = vmatpush1.msra.mxu0 0.0
    %145 = vmatprep.subr.mxu0 0.0
    %146 = vmatpush1.msra.mxu0 0.0
    %147 = vmatprep.subr.mxu0 0.0
    %148 = vmatpush1.msra.mxu0 0.0
    %149 = vmatprep.subr.mxu0 0.0
    %150 = vmatpush1.msra.mxu0 0.0
    %151 = vmatprep.subr.mxu0 0.0
    %152 = vmatpush1.msra.mxu0 0.0
    %153 = vmatprep.subr.mxu0 0.0
    %154 = vmatpush1.msra.mxu0 0.0
    %155 = vmatprep.subr.mxu0 0.0
    %156 = vmatpush1.msra.mxu0 0.0
    %157 = vmatprep.subr.mxu0 0.0
    %158 = vmatpush1.msra.mxu0 0.0
    %159 = vmatprep.subr.mxu0 0.0
    %160 = vmatpush1.msra.mxu0 0.0
    %161 = vmatprep.subr.mxu0 0.0
    %162 = vmatpush1.msra.mxu0 0.0
    %163 = vmatprep.mubr.f32.mxu0 0.0
    %164 = vmatmul.mubr.f32.gmra.mrb[0].mxu0 %v88
    %v165 = vpop.f32.mrb[0].mxu0
    %v166 = vadd.f32 %v79, %v165
    %v167 = vpop.f32.mrb[0].mxu0
    %v168 = vadd.f32 %v83, %v167
    %169 = vmatprep.mubr.f32.mxu0 0.0
    %170 = vmatmul.mubr.f32.gmra.mrb[0].mxu0 %v91
    %v171 = vpop.f32.mrb[0].mxu0
    %v172 = vadd.f32 %v79, %v171
    %v173 = vpop.f32.mrb[0].mxu0
    %v174 = vadd.f32 %v83, %v173
    %175 = vmatprep.mubr.f32.mxu0 0.0
    %176 = vmatmul.mubr.f32.gmra.mrb[0].mxu0 %v94
    %v177 = vpop.f32.mrb[0].mxu0
    %v178 = vadd.f32 %v79, %v177
    %v179 = vpop.f32.mrb[0].mxu0
    %v180 = vadd.f32 %v83, %v179
    %181 = vmatprep.mubr.f32.mxu0 0.0
    %182 = vmatmul.mubr.f32.gmra.mrb[0].mxu0 %v97
    %v183 = vpop.f32.mrb[0].mxu0
    %v184 = vadd.f32 %v79, %v183
    %v185 = vpop.f32.mrb[0].mxu0
    %v186 = vadd.f32 %v83, %v185
    %187 = vdwg.mxu0
    %190 = vrot.lane.b32.xlu0 %v166, 64
    %v191 = vpop.permute.xlu0 %190
    %192 = vrot.lane.b32.xlu0 %v172, 64
    %v193 = vpop.permute.xlu0 %192
    %vm194 = vcmask 523264
    %v195 = vsel %vm194, %v166, 0
    %v197 = vsel %vm194, %v172, 0
    %v199 = vsel %vm194, %v191, 0
    %v201 = vsel %vm194, %v193, 0
    %203 = vmatprep.subr.mxu0 0.0
    %204 = vmatpush1.xpose.msra.mxu0 %v199
    %205 = vmatprep.subr.mxu0 0.0
    %206 = vmatpush1.xpose.msra.mxu0 %v201
    %207 = vmatprep.subr.mxu0 0.0
    %208 = vmatpush1.xpose.msra.mxu0 0.0
    %209 = vmatprep.subr.mxu0 0.0
    %210 = vmatpush1.xpose.msra.mxu0 0.0
    %211 = vmatprep.subr.mxu0 0.0
    %212 = vmatpush1.xpose.msra.mxu0 0.0
    %213 = vmatprep.subr.mxu0 0.0
    %214 = vmatpush1.xpose.msra.mxu0 0.0
    %215 = vmatprep.subr.mxu0 0.0
    %216 = vmatpush1.xpose.msra.mxu0 0.0
    %217 = vmatprep.subr.mxu0 0.0
    %218 = vmatpush1.xpose.msra.mxu0 0.0
    %219 = vmatprep.subr.mxu0 0.0
    %220 = vmatpush1.xpose.msra.mxu0 0.0
    %221 = vmatprep.subr.mxu0 0.0
    %222 = vmatpush1.xpose.msra.mxu0 0.0
    %223 = vmatprep.subr.mxu0 0.0
    %224 = vmatpush1.xpose.msra.mxu0 0.0
    %225 = vmatprep.subr.mxu0 0.0
    %226 = vmatpush1.xpose.msra.mxu0 0.0
    %227 = vmatprep.subr.mxu0 0.0
    %228 = vmatpush1.xpose.msra.mxu0 0.0
    %229 = vmatprep.subr.mxu0 0.0
    %230 = vmatpush1.xpose.msra.mxu0 0.0
    %231 = vmatprep.subr.mxu0 0.0
    %232 = vmatpush1.xpose.msra.mxu0 0.0
    %233 = vmatprep.subr.mxu0 0.0
    %234 = vmatpush1.xpose.msra.mxu0 0.0
    %235 = vmatprep.subr.mxu0 0.0
    %236 = vmatpush1.xpose.msra.mxu0 0.0
    %237 = vmatprep.subr.mxu0 0.0
    %238 = vmatpush1.xpose.msra.mxu0 0.0
    %239 = vmatprep.subr.mxu0 0.0
    %240 = vmatpush1.xpose.msra.mxu0 0.0
    %241 = vmatprep.subr.mxu0 0.0
    %242 = vmatpush1.xpose.msra.mxu0 0.0
    %243 = vmatprep.subr.mxu0 0.0
    %244 = vmatpush1.xpose.msra.mxu0 0.0
    %245 = vmatprep.subr.mxu0 0.0
    %246 = vmatpush1.xpose.msra.mxu0 0.0
    %247 = vmatprep.subr.mxu0 0.0
    %248 = vmatpush1.xpose.msra.mxu0 0.0
    %249 = vmatprep.subr.mxu0 0.0
    %250 = vmatpush1.xpose.msra.mxu0 0.0
    %251 = vmatprep.subr.mxu0 0.0
    %252 = vmatpush1.xpose.msra.mxu0 0.0
    %253 = vmatprep.subr.mxu0 0.0
    %254 = vmatpush1.xpose.msra.mxu0 0.0
    %255 = vmatprep.subr.mxu0 0.0
    %256 = vmatpush1.xpose.msra.mxu0 0.0
    %257 = vmatprep.subr.mxu0 0.0
    %258 = vmatpush1.xpose.msra.mxu0 0.0
    %259 = vmatprep.subr.mxu0 0.0
    %260 = vmatpush1.xpose.msra.mxu0 0.0
    %261 = vmatprep.subr.mxu0 0.0
    %262 = vmatpush1.xpose.msra.mxu0 0.0
    %263 = vmatprep.subr.mxu0 0.0
    %264 = vmatpush1.xpose.msra.mxu0 0.0
    %265 = vmatprep.subr.mxu0 0.0
    %266 = vmatpush1.xpose.msra.mxu0 0.0
    %267 = vmatprep.mubr.f32.mxu0 0.0
    %268 = vmatmul.mubr.f32.gmra.mrb[0].mxu0 %v195
    %v269 = vpop.f32.mrb[0].mxu0
    %v270 = vadd.f32 0.0, %v269
    %v271 = vpop.f32.mrb[0].mxu0
    %272 = vmatprep.mubr.f32.mxu0 0.0
    %273 = vmatmul.mubr.f32.gmra.mrb[0].mxu0 %v197
    %v274 = vpop.f32.mrb[0].mxu0
    %v275 = vadd.f32 0.0, %v274
    %v276 = vpop.f32.mrb[0].mxu0
    %277 = vdwg.mxu0
    %280 = vrot.lane.b32.xlu0 %v178, 64
    %v281 = vpop.permute.xlu0 %280
    %282 = vrot.lane.b32.xlu0 %v184, 64
    %v283 = vpop.permute.xlu0 %282
    %v284 = vsel %vm194, %v178, 0
    %v286 = vsel %vm194, %v184, 0
    %v288 = vsel %vm194, %v281, 0
    %v290 = vsel %vm194, %v283, 0
    %292 = vmatprep.subr.mxu0 0.0
    %293 = vmatpush1.xpose.msra.mxu0 %v288
    %294 = vmatprep.subr.mxu0 0.0
    %295 = vmatpush1.xpose.msra.mxu0 %v290
    %296 = vmatprep.subr.mxu0 0.0
    %297 = vmatpush1.xpose.msra.mxu0 0.0
    %298 = vmatprep.subr.mxu0 0.0
    %299 = vmatpush1.xpose.msra.mxu0 0.0
    %300 = vmatprep.subr.mxu0 0.0
    %301 = vmatpush1.xpose.msra.mxu0 0.0
    %302 = vmatprep.subr.mxu0 0.0
    %303 = vmatpush1.xpose.msra.mxu0 0.0
    %304 = vmatprep.subr.mxu0 0.0
    %305 = vmatpush1.xpose.msra.mxu0 0.0
    %306 = vmatprep.subr.mxu0 0.0
    %307 = vmatpush1.xpose.msra.mxu0 0.0
    %308 = vmatprep.subr.mxu0 0.0
    %309 = vmatpush1.xpose.msra.mxu0 0.0
    %310 = vmatprep.subr.mxu0 0.0
    %311 = vmatpush1.xpose.msra.mxu0 0.0
    %312 = vmatprep.subr.mxu0 0.0
    %313 = vmatpush1.xpose.msra.mxu0 0.0
    %314 = vmatprep.subr.mxu0 0.0
    %315 = vmatpush1.xpose.msra.mxu0 0.0
    %316 = vmatprep.subr.mxu0 0.0
    %317 = vmatpush1.xpose.msra.mxu0 0.0
    %318 = vmatprep.subr.mxu0 0.0
    %319 = vmatpush1.xpose.msra.mxu0 0.0
    %320 = vmatprep.subr.mxu0 0.0
    %321 = vmatpush1.xpose.msra.mxu0 0.0
    %322 = vmatprep.subr.mxu0 0.0
    %323 = vmatpush1.xpose.msra.mxu0 0.0
    %324 = vmatprep.subr.mxu0 0.0
    %325 = vmatpush1.xpose.msra.mxu0 0.0
    %326 = vmatprep.subr.mxu0 0.0
    %327 = vmatpush1.xpose.msra.mxu0 0.0
    %328 = vmatprep.subr.mxu0 0.0
    %329 = vmatpush1.xpose.msra.mxu0 0.0
    %330 = vmatprep.subr.mxu0 0.0
    %331 = vmatpush1.xpose.msra.mxu0 0.0
    %332 = vmatprep.subr.mxu0 0.0
    %333 = vmatpush1.xpose.msra.mxu0 0.0
    %334 = vmatprep.subr.mxu0 0.0
    %335 = vmatpush1.xpose.msra.mxu0 0.0
    %336 = vmatprep.subr.mxu0 0.0
    %337 = vmatpush1.xpose.msra.mxu0 0.0
    %338 = vmatprep.subr.mxu0 0.0
    %339 = vmatpush1.xpose.msra.mxu0 0.0
    %340 = vmatprep.subr.mxu0 0.0
    %341 = vmatpush1.xpose.msra.mxu0 0.0
    %342 = vmatprep.subr.mxu0 0.0
    %343 = vmatpush1.xpose.msra.mxu0 0.0
    %344 = vmatprep.subr.mxu0 0.0
    %345 = vmatpush1.xpose.msra.mxu0 0.0
    %346 = vmatprep.subr.mxu0 0.0
    %347 = vmatpush1.xpose.msra.mxu0 0.0
    %348 = vmatprep.subr.mxu0 0.0
    %349 = vmatpush1.xpose.msra.mxu0 0.0
    %350 = vmatprep.subr.mxu0 0.0
    %351 = vmatpush1.xpose.msra.mxu0 0.0
    %352 = vmatprep.subr.mxu0 0.0
    %353 = vmatpush1.xpose.msra.mxu0 0.0
    %354 = vmatprep.subr.mxu0 0.0
    %355 = vmatpush1.xpose.msra.mxu0 0.0
    %356 = vmatprep.mubr.f32.mxu0 0.0
    %357 = vmatmul.mubr.f32.gmra.mrb[0].mxu0 %v284
    %v358 = vpop.f32.mrb[0].mxu0
    %v359 = vadd.f32 0.0, %v358
    %v360 = vpop.f32.mrb[0].mxu0
    %361 = vmatprep.mubr.f32.mxu0 0.0
    %362 = vmatmul.mubr.f32.gmra.mrb[0].mxu0 %v286
    %v363 = vpop.f32.mrb[0].mxu0
    %v364 = vadd.f32 0.0, %v363
    %v365 = vpop.f32.mrb[0].mxu0
    %366 = vdwg.mxu0
    %vm367 = vcmask 130048
    %v368 = vsel %vm367, %v270, -inf
    %369 = vmax.xlane.f32.xlu0 %v368
    %v370 = vpop.xlane.xlu0 %369
    %v371 = vsel %vm367, %v275, -inf
    %372 = vmax.xlane.f32.xlu0 %v371
    %v373 = vpop.xlane.xlu0 %372
    %v374 = vsel %vm367, %v359, -inf
    %375 = vmax.xlane.f32.xlu0 %v374
    %v376 = vpop.xlane.xlu0 %375
    %v377 = vsel %vm367, %v364, -inf
    %378 = vmax.xlane.f32.xlu0 %v377
    %v379 = vpop.xlane.xlu0 %378
    %v380 = vsub.f32 %v270, %v370
    %v381 = vsub.f32 %v275, %v373
    %v382 = vsub.f32 %v359, %v376
    %v383 = vsub.f32 %v364, %v379
    %v384 = vmul.f32 %v380, 1.442695
    %v385 = vpow.pop %v384
    %v386 = vmul.f32 %v381, 1.442695
    %v387 = vpow.pop %v386
    %v388 = vmul.f32 %v382, 1.442695
    %v389 = vpow.pop %v388
    %v390 = vmul.f32 %v383, 1.442695
    %v391 = vpow.pop %v390
    %v392 = vsel %vm367, %v385, 0.0
    %393 = vadd.xlane.f32.xlu0 %v392
    %v394 = vpop.xlane.xlu0 %393
    %v395 = vsel %vm367, %v387, 0.0
    %396 = vadd.xlane.f32.xlu0 %v395
    %v397 = vpop.xlane.xlu0 %396
    %v398 = vsel %vm367, %v389, 0.0
    %399 = vadd.xlane.f32.xlu0 %v398
    %v400 = vpop.xlane.xlu0 %399
    %v401 = vsel %vm367, %v391, 0.0
    %402 = vadd.xlane.f32.xlu0 %v401
    %v403 = vpop.xlane.xlu0 %402
    %v404 = vrcp.pop %v394
    %v405 = vrcp.pop %v397
    %v406 = vrcp.pop %v400
    %v407 = vrcp.pop %v403
    %v408 = vmul.f32 %v385, %v404
    %v409 = vmul.f32 %v387, %v405
    %v410 = vmul.f32 %v389, %v406
    %v411 = vmul.f32 %v391, %v407
    %v413 = vsel %vm367, %v408, 0
    %v416 = vsel %vm367, %v409, 0
    %418 = vmatprep.subr.mxu0 0.0
    %419 = vmatpush1.msra.mxu0 %v168
    %420 = vmatprep.subr.mxu0 0.0
    %421 = vmatpush1.msra.mxu0 %v174
    %422 = vmatprep.subr.mxu0 0.0
    %423 = vmatpush1.msra.mxu0 0.0
    %424 = vmatprep.subr.mxu0 0.0
    %425 = vmatpush1.msra.mxu0 0.0
    %426 = vmatprep.subr.mxu0 0.0
    %427 = vmatpush1.msra.mxu0 0.0
    %428 = vmatprep.subr.mxu0 0.0
    %429 = vmatpush1.msra.mxu0 0.0
    %430 = vmatprep.subr.mxu0 0.0
    %431 = vmatpush1.msra.mxu0 0.0
    %432 = vmatprep.subr.mxu0 0.0
    %433 = vmatpush1.msra.mxu0 0.0
    %434 = vmatprep.subr.mxu0 0.0
    %435 = vmatpush1.msra.mxu0 0.0
    %436 = vmatprep.subr.mxu0 0.0
    %437 = vmatpush1.msra.mxu0 0.0
    %438 = vmatprep.subr.mxu0 0.0
    %439 = vmatpush1.msra.mxu0 0.0
    %440 = vmatprep.subr.mxu0 0.0
    %441 = vmatpush1.msra.mxu0 0.0
    %442 = vmatprep.subr.mxu0 0.0
    %443 = vmatpush1.msra.mxu0 0.0
    %444 = vmatprep.subr.mxu0 0.0
    %445 = vmatpush1.msra.mxu0 0.0
    %446 = vmatprep.subr.mxu0 0.0
    %447 = vmatpush1.msra.mxu0 0.0
    %448 = vmatprep.subr.mxu0 0.0
    %449 = vmatpush1.msra.mxu0 0.0
    %450 = vmatprep.subr.mxu0 0.0
    %451 = vmatpush1.msra.mxu0 0.0
    %452 = vmatprep.subr.mxu0 0.0
    %453 = vmatpush1.msra.mxu0 0.0
    %454 = vmatprep.subr.mxu0 0.0
    %455 = vmatpush1.msra.mxu0 0.0
    %456 = vmatprep.subr.mxu0 0.0
    %457 = vmatpush1.msra.mxu0 0.0
    %458 = vmatprep.subr.mxu0 0.0
    %459 = vmatpush1.msra.mxu0 0.0
    %460 = vmatprep.subr.mxu0 0.0
    %461 = vmatpush1.msra.mxu0 0.0
    %462 = vmatprep.subr.mxu0 0.0
    %463 = vmatpush1.msra.mxu0 0.0
    %464 = vmatprep.subr.mxu0 0.0
    %465 = vmatpush1.msra.mxu0 0.0
    %466 = vmatprep.subr.mxu0 0.0
    %467 = vmatpush1.msra.mxu0 0.0
    %468 = vmatprep.subr.mxu0 0.0
    %469 = vmatpush1.msra.mxu0 0.0
    %470 = vmatprep.subr.mxu0 0.0
    %471 = vmatpush1.msra.mxu0 0.0
    %472 = vmatprep.subr.mxu0 0.0
    %473 = vmatpush1.msra.mxu0 0.0
    %474 = vmatprep.subr.mxu0 0.0
    %475 = vmatpush1.msra.mxu0 0.0
    %476 = vmatprep.subr.mxu0 0.0
    %477 = vmatpush1.msra.mxu0 0.0
    %478 = vmatprep.subr.mxu0 0.0
    %479 = vmatpush1.msra.mxu0 0.0
    %480 = vmatprep.subr.mxu0 0.0
    %481 = vmatpush1.msra.mxu0 0.0
    %482 = vmatprep.mubr.f32.mxu0 0.0
    %483 = vmatmul.mubr.f32.gmra.mrb[0].mxu0 %v413
    %v484 = vpop.f32.mrb[0].mxu0
    %v485 = vadd.f32 0.0, %v484
    %v486 = vpop.f32.mrb[0].mxu0
    %487 = vmatprep.mubr.f32.mxu0 0.0
    %488 = vmatmul.mubr.f32.gmra.mrb[0].mxu0 %v416
    %v489 = vpop.f32.mrb[0].mxu0
    %v490 = vadd.f32 0.0, %v489
    %v491 = vpop.f32.mrb[0].mxu0
    %492 = vdwg.mxu0
    %v494 = vsel %vm367, %v410, 0
    %v497 = vsel %vm367, %v411, 0
    %499 = vmatprep.subr.mxu0 0.0
    %500 = vmatpush1.msra.mxu0 %v180
    %501 = vmatprep.subr.mxu0 0.0
    %502 = vmatpush1.msra.mxu0 %v186
    %503 = vmatprep.subr.mxu0 0.0
    %504 = vmatpush1.msra.mxu0 0.0
    %505 = vmatprep.subr.mxu0 0.0
    %506 = vmatpush1.msra.mxu0 0.0
    %507 = vmatprep.subr.mxu0 0.0
    %508 = vmatpush1.msra.mxu0 0.0
    %509 = vmatprep.subr.mxu0 0.0
    %510 = vmatpush1.msra.mxu0 0.0
    %511 = vmatprep.subr.mxu0 0.0
    %512 = vmatpush1.msra.mxu0 0.0
    %513 = vmatprep.subr.mxu0 0.0
    %514 = vmatpush1.msra.mxu0 0.0
    %515 = vmatprep.subr.mxu0 0.0
    %516 = vmatpush1.msra.mxu0 0.0
    %517 = vmatprep.subr.mxu0 0.0
    %518 = vmatpush1.msra.mxu0 0.0
    %519 = vmatprep.subr.mxu0 0.0
    %520 = vmatpush1.msra.mxu0 0.0
    %521 = vmatprep.subr.mxu0 0.0
    %522 = vmatpush1.msra.mxu0 0.0
    %523 = vmatprep.subr.mxu0 0.0
    %524 = vmatpush1.msra.mxu0 0.0
    %525 = vmatprep.subr.mxu0 0.0
    %526 = vmatpush1.msra.mxu0 0.0
    %527 = vmatprep.subr.mxu0 0.0
    %528 = vmatpush1.msra.mxu0 0.0
    %529 = vmatprep.subr.mxu0 0.0
    %530 = vmatpush1.msra.mxu0 0.0
    %531 = vmatprep.subr.mxu0 0.0
    %532 = vmatpush1.msra.mxu0 0.0
    %533 = vmatprep.subr.mxu0 0.0
    %534 = vmatpush1.msra.mxu0 0.0
    %535 = vmatprep.subr.mxu0 0.0
    %536 = vmatpush1.msra.mxu0 0.0
    %537 = vmatprep.subr.mxu0 0.0
    %538 = vmatpush1.msra.mxu0 0.0
    %539 = vmatprep.subr.mxu0 0.0
    %540 = vmatpush1.msra.mxu0 0.0
    %541 = vmatprep.subr.mxu0 0.0
    %542 = vmatpush1.msra.mxu0 0.0
    %543 = vmatprep.subr.mxu0 0.0
    %544 = vmatpush1.msra.mxu0 0.0
    %545 = vmatprep.subr.mxu0 0.0
    %546 = vmatpush1.msra.mxu0 0.0
    %547 = vmatprep.subr.mxu0 0.0
    %548 = vmatpush1.msra.mxu0 0.0
    %549 = vmatprep.subr.mxu0 0.0
    %550 = vmatpush1.msra.mxu0 0.0
    %551 = vmatprep.subr.mxu0 0.0
    %552 = vmatpush1.msra.mxu0 0.0
    %553 = vmatprep.subr.mxu0 0.0
    %554 = vmatpush1.msra.mxu0 0.0
    %555 = vmatprep.subr.mxu0 0.0
    %556 = vmatpush1.msra.mxu0 0.0
    %557 = vmatprep.subr.mxu0 0.0
    %558 = vmatpush1.msra.mxu0 0.0
    %559 = vmatprep.subr.mxu0 0.0
    %560 = vmatpush1.msra.mxu0 0.0
    %561 = vmatprep.subr.mxu0 0.0
    %562 = vmatpush1.msra.mxu0 0.0
    %563 = vmatprep.mubr.f32.mxu0 0.0
    %564 = vmatmul.mubr.f32.gmra.mrb[0].mxu0 %v494
    %v565 = vpop.f32.mrb[0].mxu0
    %v566 = vadd.f32 0.0, %v565
    %v567 = vpop.f32.mrb[0].mxu0
    %568 = vmatprep.mubr.f32.mxu0 0.0
    %569 = vmatmul.mubr.f32.gmra.mrb[0].mxu0 %v497
    %v570 = vpop.f32.mrb[0].mxu0
    %v571 = vadd.f32 0.0, %v570
    %v572 = vpop.f32.mrb[0].mxu0
    %573 = vdwg.mxu0
    %v574 = vld [vmem:[#allocation7] sm:$0xff]
    %v575 = vld [vmem:[#allocation7 + $0x8] sm:$0xff]
    %v576 = vld [vmem:[#allocation7 + $0x10] sm:$0xff]
    %v577 = vld [vmem:[#allocation7 + $0x18] sm:$0xff]
    %v578 = vld [vmem:[#allocation7 + $0x20] sm:$0xff]
    %v579 = vld [vmem:[#allocation7 + $0x28] sm:$0xff]
    %v580 = vld [vmem:[#allocation7 + $0x30] sm:$0xff]
    %v581 = vld [vmem:[#allocation7 + $0x38] sm:$0xff]
    %v582 = vld [vmem:[%s4] sm:$0x1]
    %v584 = vlaneseq
    %v585 = vshrl.u32 %v584, 7
    %v586 = vsub.s32 0, %v585
    %v587 = vrot.slane %v582, %v586
    %v590 = vsel %vm194, %v485, 0
    %v593 = vsel %vm194, %v490, 0
    %v596 = vsel %vm194, %v566, 0
    %v599 = vsel %vm194, %v571, 0
    %601 = vmatprep.subr.mxu0 0.0
    %602 = vmatpush1.msra.mxu0 %v574
    %603 = vmatprep.subr.mxu0 0.0
    %604 = vmatpush1.msra.mxu0 %v575
    %605 = vmatprep.subr.mxu0 0.0
    %606 = vmatpush1.msra.mxu0 %v576
    %607 = vmatprep.subr.mxu0 0.0
    %608 = vmatpush1.msra.mxu0 %v577
    %609 = vmatprep.subr.mxu0 0.0
    %610 = vmatpush1.msra.mxu0 %v578
    %611 = vmatprep.subr.mxu0 0.0
    %612 = vmatpush1.msra.mxu0 %v579
    %613 = vmatprep.subr.mxu0 0.0
    %614 = vmatpush1.msra.mxu0 %v580
    %615 = vmatprep.subr.mxu0 0.0
    %616 = vmatpush1.msra.mxu0 %v581
    %617 = vmatprep.subr.mxu0 0.0
    %618 = vmatpush1.msra.mxu0 0.0
    %619 = vmatprep.subr.mxu0 0.0
    %620 = vmatpush1.msra.mxu0 0.0
    %621 = vmatprep.subr.mxu0 0.0
    %622 = vmatpush1.msra.mxu0 0.0
    %623 = vmatprep.subr.mxu0 0.0
    %624 = vmatpush1.msra.mxu0 0.0
    %625 = vmatprep.subr.mxu0 0.0
    %626 = vmatpush1.msra.mxu0 0.0
    %627 = vmatprep.subr.mxu0 0.0
    %628 = vmatpush1.msra.mxu0 0.0
    %629 = vmatprep.subr.mxu0 0.0
    %630 = vmatpush1.msra.mxu0 0.0
    %631 = vmatprep.subr.mxu0 0.0
    %632 = vmatpush1.msra.mxu0 0.0
    %633 = vmatprep.subr.mxu0 0.0
    %634 = vmatpush1.msra.mxu0 0.0
    %635 = vmatprep.subr.mxu0 0.0
    %636 = vmatpush1.msra.mxu0 0.0
    %637 = vmatprep.subr.mxu0 0.0
    %638 = vmatpush1.msra.mxu0 0.0
    %639 = vmatprep.subr.mxu0 0.0
    %640 = vmatpush1.msra.mxu0 0.0
    %641 = vmatprep.subr.mxu0 0.0
    %642 = vmatpush1.msra.mxu0 0.0
    %643 = vmatprep.subr.mxu0 0.0
    %644 = vmatpush1.msra.mxu0 0.0
    %645 = vmatprep.subr.mxu0 0.0
    %646 = vmatpush1.msra.mxu0 0.0
    %647 = vmatprep.subr.mxu0 0.0
    %648 = vmatpush1.msra.mxu0 0.0
    %649 = vmatprep.subr.mxu0 0.0
    %650 = vmatpush1.msra.mxu0 0.0
    %651 = vmatprep.subr.mxu0 0.0
    %652 = vmatpush1.msra.mxu0 0.0
    %653 = vmatprep.subr.mxu0 0.0
    %654 = vmatpush1.msra.mxu0 0.0
    %655 = vmatprep.subr.mxu0 0.0
    %656 = vmatpush1.msra.mxu0 0.0
    %657 = vmatprep.subr.mxu0 0.0
    %658 = vmatpush1.msra.mxu0 0.0
    %659 = vmatprep.subr.mxu0 0.0
    %660 = vmatpush1.msra.mxu0 0.0
    %661 = vmatprep.subr.mxu0 0.0
    %662 = vmatpush1.msra.mxu0 0.0
    %663 = vmatprep.subr.mxu0 0.0
    %664 = vmatpush1.msra.mxu0 0.0
    %665 = vmatprep.mubr.f32.mxu0 0.0
    %666 = vmatmul.mubr.f32.gmra.mrb[0].mxu0 %v590
    %v667 = vpop.f32.mrb[0].mxu0
    %v668 = vadd.f32 %v587, %v667
    %v669 = vpop.f32.mrb[0].mxu0
    %670 = vmatprep.mubr.f32.mxu0 0.0
    %671 = vmatmul.mubr.f32.gmra.mrb[0].mxu0 %v593
    %v672 = vpop.f32.mrb[0].mxu0
    %v673 = vadd.f32 %v587, %v672
    %v674 = vpop.f32.mrb[0].mxu0
    %675 = vmatprep.mubr.f32.mxu0 0.0
    %676 = vmatmul.mubr.f32.gmra.mrb[0].mxu0 %v596
    %v677 = vpop.f32.mrb[0].mxu0
    %v678 = vadd.f32 %v587, %v677
    %v679 = vpop.f32.mrb[0].mxu0
    %680 = vmatprep.mubr.f32.mxu0 0.0
    %681 = vmatmul.mubr.f32.gmra.mrb[0].mxu0 %v599
    %v682 = vpop.f32.mrb[0].mxu0
    %v683 = vadd.f32 %v587, %v682
    %v684 = vpop.f32.mrb[0].mxu0
    %685 = vdwg.mxu0
    %686 = vst [vmem:[#allocation8] sm:$0xff] %v668
    %687 = vst [vmem:[#allocation8 + $0x8] sm:$0xff] %v673
    %688 = vst [vmem:[#allocation8 + $0x10] sm:$0xff] %v678
    %689 = vst [vmem:[#allocation8 + $0x18] sm:$0xff] %v683
    // Predicated region
    $region34: #{tpu_custom_call.1} parent=1 // pred_check
      _
    $region35: #{tpu_custom_call.1} parent=1 // pred_check_branch
      %691 = sbr.rel (0) target = $region37
    $region36: #{tpu_custom_call.1} parent=1 // pred_region
      %s693 = ssub.s32 512, 512
      %694 = vsyncadd [#allocation4], %s693
      %s695 = sshll.u32 [#allocation8], 4
      %s696 = int_to_ptr.vmem [resolvable:$true] %s695
      %701 = dma.vmem_to_hbm [thread:$0]  %s696, 512, %s5, [#allocation4], 128, 128, 8
    $region37: #{tpu_custom_call.1} parent=1 // pred_fallthru
      _
    // Predicated region
    $region38: #{tpu_custom_call.1} parent=1 // pred_check
      _
    $region39: #{tpu_custom_call.1} parent=1 // pred_check_branch
      %703 = sbr.rel (0) target = $region41
    $region40: #{tpu_custom_call.1} parent=1 // pred_region
      %704 = dma.done [#allocation4], 512
    $region41: #{tpu_custom_call.1} parent=1 // pred_fallthru
      _
    %705 = vsyncpa [#allocation3], 1
    %706 = vsyncpa [#allocation6], 1
    %707 = vsyncpa [#allocation4], 1

</llo_original>
